<compile_context>
chip_gen: v7x
topology: tpu7x:2x2x1
jax: 0.10.0
libtpu: 0.0.40
codegen_flags: <defaults>
</compile_context>

<pallas_src>
import functools

import jax
import jax.numpy as jnp
from jax.experimental import pallas as pl
from jax.experimental.pallas import tpu as pltpu


def _round_up(x: int, m: int) -> int:
    return (x + m - 1) // m * m


def _vmem_caps():
    """(tile budget bytes, vmem_limit_bytes) sized per TPU generation."""
    try:
        cap = int(pltpu.get_tpu_info().vmem_capacity_bytes)
    except Exception:
        cap = 64 * 1024 * 1024                       # conservative fallback (v7x-sized)
    if cap >= 100 * 1024 * 1024:                     # v5e / v6e: 128 MiB physical VMEM
        return 80 * 1024 * 1024, 100 * 1024 * 1024
    return 20 * 1024 * 1024, 32 * 1024 * 1024        # v7x: 64 MiB physical VMEM


# ----------------------------------------------------------------------------
# Kernel 1: synthetic encoder (linear projection) + masked mean pooling
# ----------------------------------------------------------------------------
def encode_pool_kernel(x_ref, mask_ref, w_ref, out_ref, *, compute_dtype):
    # Tokens/mask stream as bf16 (halves the dominant HBM read); upcast to f32
    # after load (v5e VPU has no bf16) and keep f32 accumulation.
    x = x_ref[...].astype(jnp.float32)                # (TB, S, Hin)
    m = mask_ref[...].astype(jnp.float32)             # (TB, S)

    # Exploit linearity: masked-sum over S BEFORE the projection.
    # sum_s((x @ w) * mask) == (sum_s(x * mask)) @ w  -> S x fewer MXU FLOPs and
    # no (TB, S, Hout) intermediate.
    xm = jnp.sum(x * m[:, :, None], axis=1)                               # (TB, Hin)
    denom = jnp.maximum(jnp.sum(m, axis=1, keepdims=True), 1e-9)          # (TB, 1)
    xm = xm / denom                     # exact divide: only TB scalars, keeps f32 accuracy

    pooled = jnp.dot(
        xm.astype(compute_dtype), w_ref[...],          # bf16 MXU, f32 accumulation
        preferred_element_type=jnp.float32,
    )                                                  # (TB, Hout_pad)
    out_ref[...] = pooled.astype(out_ref.dtype)


def _pick_block_b(n, s, hin, hout_p, tok_bytes, w_bytes, budget_bytes):
    """Largest multiple-of-16 batch tile whose footprint (incl. the f32 upcast and
    masked-product temporaries) fits the generation-specific VMEM budget."""
    bb = min(_round_up(n, 16), 512)

    def est(tb):
        return (2 * tb * s * hin * tok_bytes     # x tiles (double-buffered DMA)
                + 2 * tb * s * hin * 4           # f32 upcast + masked-product temporaries
                + 2 * tb * s * tok_bytes         # mask tiles
                + 2 * hin * hout_p * w_bytes     # weight (counted double-buffered: conservative)
                + 2 * tb * hout_p * 4            # out tiles
                + tb * hout_p * 4)               # f32 matmul result before downcast

    while bb > 16 and est(bb) > budget_bytes:
        bb -= 16
    return bb


def encode_and_pool(tok, mask, w_pad, *, compute_dtype, out_dtype,
                    budget_bytes, vmem_limit_bytes):
    """tok: (N, S, Hin), mask: (N, S), w_pad: (Hin, Hout_pad) -> (N, Hout_pad).

    No batch padding / no concat: grid = cdiv(N, block_b); Pallas masks the
    boundary block (padded rows are independent and their stores are dropped).
    """
    N, S, Hin = tok.shape
    Hout_p = w_pad.shape[1]

    block_b = _pick_block_b(N, S, Hin, Hout_p, tok.dtype.itemsize,
                            w_pad.dtype.itemsize, budget_bytes)

    kernel = functools.partial(encode_pool_kernel, compute_dtype=compute_dtype)
    out = pl.pallas_call(
        kernel,
        out_shape=jax.ShapeDtypeStruct((N, Hout_p), out_dtype),
        grid_spec=pltpu.PrefetchScalarGridSpec(
            num_scalar_prefetch=0,
            grid=(pl.cdiv(N, block_b),),
            in_specs=[
                pl.BlockSpec((block_b, S, Hin), lambda i: (i, 0, 0)),
                pl.BlockSpec((block_b, S), lambda i: (i, 0)),
                pl.BlockSpec((Hin, Hout_p), lambda i: (0, 0)),   # weight resident
            ],
            out_specs=pl.BlockSpec((block_b, Hout_p), lambda i: (i, 0)),
        ),
        compiler_params=pltpu.CompilerParams(
            dimension_semantics=("parallel",),        # shards across TCs on v7x
            vmem_limit_bytes=vmem_limit_bytes,
        ),
    )(tok, mask, w_pad)
    return out


# ----------------------------------------------------------------------------
# Kernel 2: dot-product similarity * sim_scale + cross-entropy loss
#           (gridded: query tiles parallel, passage tiles = online-softmax reduce)
# ----------------------------------------------------------------------------
def sim_loss_kernel(q_ref, p_ref, sim_ref, nll_ref, m_sc, l_sc, pick_sc, *,
                    sim_scale, npsgs, n_queries, n_passages,
                    tile_q, tile_p, compute_dtype):
    i = pl.program_id(0)          # query tile  ("parallel")
    j = pl.program_id(1)          # passage tile ("arbitrary" reduction axis)

    @pl.when(j == 0)
    def _():
        m_sc[...] = jnp.full_like(m_sc, -1e30)
        l_sc[...] = jnp.zeros_like(l_sc)
        pick_sc[...] = jnp.zeros_like(pick_sc)

    q = q_ref[...].astype(compute_dtype)               # (tq, H)
    p = p_ref[...].astype(compute_dtype)               # (tp, H)
    # Contract on the last dims directly: no explicit (tp, H) transpose in-kernel.
    sim = jax.lax.dot_general(
        q, p, (((1,), (1,)), ((), ())),
        preferred_element_type=jnp.float32,
    ) * sim_scale                                       # (tq, tp) f32, lane-dense tile
    sim_ref[...] = sim

    row = jax.lax.broadcasted_iota(jnp.int32, (tile_q, tile_p), 0) + i * tile_q
    col = jax.lax.broadcasted_iota(jnp.int32, (tile_q, tile_p), 1) + j * tile_p

    # Online softmax statistics, with padded passage columns masked out.
    sim_m = jnp.where(col < n_passages, sim, -1e30)
    m_new = jnp.maximum(m_sc[...], jnp.max(sim_m, axis=-1, keepdims=True))
    alpha = jnp.exp(m_sc[...] - m_new)
    l_sc[...] = alpha * l_sc[...] + jnp.sum(jnp.exp(sim_m - m_new), axis=-1, keepdims=True)
    m_sc[...] = m_new

    # picked[r] = sim[r, r*npsgs]  (label column; exactly one tile contains it)
    hit = col == row * npsgs
    pick_sc[...] += jnp.sum(jnp.where(hit, sim, 0.0), axis=-1, keepdims=True)

    @pl.when(j == pl.num_programs(1) - 1)
    def _():
        lse = m_sc[...] + jnp.log(l_sc[...])            # (tq, 1)
        per_row = lse - pick_sc[...]
        row_valid = (jax.lax.broadcasted_iota(jnp.int32, (tile_q, 1), 0)
                     + i * tile_q) < n_queries
        nll_ref[...] = jnp.where(row_valid, per_row, 0.0)


def similarity_and_loss(qembs, pembs, *, sim_scale, npsgs_per_query,
                        compute_dtype, vmem_limit_bytes):
    Q, H = qembs.shape
    P, _ = pembs.shape

    tile_q = min(256, _round_up(Q, 8))
    Qp = _round_up(Q, tile_q)
    Pp128 = _round_up(max(P, 128), 128)
    tile_p = min(512, Pp128)
    Pp = _round_up(Pp128, tile_p)

    # Embeddings are small (N x H) -- padding them is cheap, unlike the token tensors.
    q_pad = jnp.pad(qembs, ((0, Qp - Q), (0, 0)))
    p_pad = jnp.pad(pembs, ((0, Pp - P), (0, 0)))

    kernel = functools.partial(
        sim_loss_kernel, sim_scale=sim_scale, npsgs=npsgs_per_query,
        n_queries=Q, n_passages=P, tile_q=tile_q, tile_p=tile_p,
        compute_dtype=compute_dtype)

    sim_pad, nll = pl.pallas_call(
        kernel,
        out_shape=(
            jax.ShapeDtypeStruct((Qp, Pp), jnp.float32),
            jax.ShapeDtypeStruct((Qp, 1), jnp.float32),
        ),
        grid_spec=pltpu.PrefetchScalarGridSpec(
            num_scalar_prefetch=0,
            grid=(Qp // tile_q, Pp // tile_p),
            in_specs=[
                pl.BlockSpec((tile_q, H), lambda i, j: (i, 0)),
                pl.BlockSpec((tile_p, H), lambda i, j: (j, 0)),
            ],
            out_specs=[
                pl.BlockSpec((tile_q, tile_p), lambda i, j: (i, j)),
                pl.BlockSpec((tile_q, 1), lambda i, j: (i, 0)),
            ],
            scratch_shapes=[
                pltpu.VMEM((tile_q, 1), jnp.float32),   # running max
                pltpu.VMEM((tile_q, 1), jnp.float32),   # running sum
                pltpu.VMEM((tile_q, 1), jnp.float32),   # picked logit
            ],
        ),
        compiler_params=pltpu.CompilerParams(
            dimension_semantics=("parallel", "arbitrary"),
            vmem_limit_bytes=vmem_limit_bytes,
        ),
    )(q_pad, p_pad)

    loss = jnp.sum(nll) / Q        # padded query rows contribute exactly 0
    return sim_pad[:Q, :P], loss


# ----------------------------------------------------------------------------
# Retriever.forward (synthetic): queries + passages -> {'loss', 'sim_mtrx'}
# ----------------------------------------------------------------------------
def retriever_forward(q_tok, q_mask, p_tok, p_mask, w, sim_scale=1.0,
                      compute_dtype=jnp.bfloat16):
    Q = q_tok.shape[0]
    P = p_tok.shape[0]
    assert P % Q == 0, "number of passages must be a multiple of number of queries"

    Hin, Hout = w.shape
    Hout_p = _round_up(max(Hout, 128), 128)           # lane-dense pooled embeddings
    w_pad = jnp.zeros((Hin, Hout_p), compute_dtype).at[:, :Hout].set(
        w.astype(compute_dtype))

    budget_bytes, vmem_limit_bytes = _vmem_caps()
    emb_dtype = jnp.bfloat16 if compute_dtype == jnp.bfloat16 else jnp.float32

    # Shared encoder weights, but TWO launches (queries, passages): re-DMA-ing the
    # small weight is far cheaper than materializing a concatenated+padded copy of
    # the token tensors in HBM (the encode stage is HBM-bound).
    qembs = encode_and_pool(q_tok, q_mask, w_pad, compute_dtype=compute_dtype,
                            out_dtype=emb_dtype, budget_bytes=budget_bytes,
                            vmem_limit_bytes=vmem_limit_bytes)
    pembs = encode_and_pool(p_tok, p_mask, w_pad, compute_dtype=compute_dtype,
                            out_dtype=emb_dtype, budget_bytes=budget_bytes,
                            vmem_limit_bytes=vmem_limit_bytes)

    npsgs_per_query = P // Q
    sim, loss = similarity_and_loss(
        qembs, pembs, sim_scale=sim_scale, npsgs_per_query=npsgs_per_query,
        compute_dtype=compute_dtype, vmem_limit_bytes=vmem_limit_bytes)
    return {"loss": loss, "sim_mtrx": sim}


# ----------------------------------------------------------------------------
# Pure-JAX reference (for correctness check) -- f32 math on the same inputs
# ----------------------------------------------------------------------------
def reference_forward(q_tok, q_mask, p_tok, p_mask, w, sim_scale=1.0):
    w32 = w.astype(jnp.float32)

    def enc(x, m):
        x = x.astype(jnp.float32)
        m = m.astype(jnp.float32)
        tokm = jnp.einsum("bsh,hd->bsd", x, w32)
        m3 = m[:, :, None]
        return jnp.sum(tokm * m3, axis=1) / jnp.clip(jnp.sum(m3, axis=1), 1e-9, None)

    qembs = enc(q_tok, q_mask)
    pembs = enc(p_tok, p_mask)
    sim = (qembs @ pembs.T) * sim_scale
    npsgs = pembs.shape[0] // qembs.shape[0]
    labels = jnp.arange(qembs.shape[0]) * npsgs
    logp = jax.nn.log_softmax(sim, axis=-1)
    loss = -jnp.mean(logp[jnp.arange(qembs.shape[0]), labels])
    return sim, loss


if __name__ == "__main__":
    key = jax.random.PRNGKey(0)
    n_queries = 2
    npsgs_per_query = 2
    n_passages = n_queries * npsgs_per_query
    seq_q, seq_p, hidden_in, hidden_out = 8, 8, 32, 32
    sim_scale = 1.0

    k1, k2, k3, k4, k5 = jax.random.split(key, 5)
    # Tokens / masks stream as bf16 (the kernels upcast internally).
    q_tok = jax.random.normal(k1, (n_queries, seq_q, hidden_in), jnp.float32).astype(jnp.bfloat16)
    p_tok = jax.random.normal(k2, (n_passages, seq_p, hidden_in), jnp.float32).astype(jnp.bfloat16)
    q_mask = (jax.random.uniform(k3, (n_queries, seq_q)) > 0.25).astype(jnp.bfloat16)
    q_mask = q_mask.at[:, 0].set(1.0)
    p_mask = (jax.random.uniform(k4, (n_passages, seq_p)) > 0.25).astype(jnp.bfloat16)
    p_mask = p_mask.at[:, 0].set(1.0)
    # deterministic synthetic "encoder" weight
    w = jax.random.normal(k5, (hidden_in, hidden_out), jnp.float32) * 0.05

    out = retriever_forward(q_tok, q_mask, p_tok, p_mask, w, sim_scale)
    loss = jax.block_until_ready(out["loss"])
    sim = jax.block_until_ready(out["sim_mtrx"])

    ref_sim, ref_loss = reference_forward(q_tok, q_mask, p_tok, p_mask, w, sim_scale)
    assert sim.shape == (n_queries, n_passages), "sim shape mismatch"
    # tolerance covers the bf16 MXU / bf16 embedding path (f32 accumulation keeps
    # the error well below 1e-2 at these magnitudes)
    assert jnp.allclose(sim, ref_sim, atol=1e-2, rtol=1e-2), "sim mismatch"
    assert jnp.allclose(loss, ref_loss, atol=1e-2, rtol=1e-2), "loss mismatch"

    print("KERNEL_OK")
</pallas_src>

<mosaic_0001>
module attributes {stable_mosaic.version = 11 : i64} {
  func.func @encode_pool_kernel(%arg0: i32, %arg1: memref<16x8x32xbf16, #tpu.memory_space<vmem>>, %arg2: memref<16x8xbf16, #tpu.memory_space<vmem>>, %arg3: memref<32x128xbf16, #tpu.memory_space<vmem>>, %arg4: memref<16x128xbf16, #tpu.memory_space<vmem>>) attributes {dimension_semantics = [#tpu.dimension_semantics<parallel>], iteration_bounds = array<i64: 1>, scalar_prefetch = 0 : i64, scratch_operands = 0 : i64, tpu.core_type = #tpu.core_type<tc>, window_params = [{transform_indices = @transform_0, window_bounds = array<i64: 16, 8, 32>}, {transform_indices = @transform_1, window_bounds = array<i64: 16, 8>}, {pipeline_mode = #tpu.pipeline_mode<synchronous>, transform_indices = @transform_2, window_bounds = array<i64: 32, 128>}, {transform_indices = @transform_3, window_bounds = array<i64: 16, 128>}]} {
    %c0 = arith.constant 0 : index
    %c0_0 = arith.constant 0 : index
    %c0_1 = arith.constant 0 : index
    %0 = vector.load %arg1[%c0, %c0_0, %c0_1] : memref<16x8x32xbf16, #tpu.memory_space<vmem>>, vector<16x8x32xbf16>
    %1 = arith.extf %0 : vector<16x8x32xbf16> to vector<16x8x32xf32>
    %c0_2 = arith.constant 0 : index
    %c0_3 = arith.constant 0 : index
    %2 = vector.load %arg2[%c0_2, %c0_3] : memref<16x8xbf16, #tpu.memory_space<vmem>>, vector<16x8xbf16>
    %3 = arith.extf %2 : vector<16x8xbf16> to vector<16x8xf32>
    %4 = vector.shape_cast %3 : vector<16x8xf32> to vector<16x8x1xf32>
    %5 = vector.broadcast %4 : vector<16x8x1xf32> to vector<16x8x32xf32>
    %6 = arith.mulf %1, %5 : vector<16x8x32xf32>
    %cst = arith.constant dense<0.000000e+00> : vector<16x32xf32>
    %7 = vector.multi_reduction <add>, %6, %cst [1] : vector<16x8x32xf32> to vector<16x32xf32>
    %cst_4 = arith.constant dense<0.000000e+00> : vector<16xf32>
    %8 = vector.multi_reduction <add>, %3, %cst_4 [1] : vector<16x8xf32> to vector<16xf32>
    %9 = vector.shape_cast %8 : vector<16xf32> to vector<16x1xf32>
    %cst_5 = arith.constant 9.99999971E-10 : f32
    %10 = vector.broadcast %cst_5 : f32 to vector<16x1xf32>
    %11 = arith.maximumf %9, %10 : vector<16x1xf32>
    %12 = vector.broadcast %11 : vector<16x1xf32> to vector<16x32xf32>
    %13 = arith.divf %7, %12 : vector<16x32xf32>
    %14 = arith.truncf %13 : vector<16x32xf32> to vector<16x32xbf16>
    %c0_6 = arith.constant 0 : index
    %c0_7 = arith.constant 0 : index
    %15 = vector.load %arg3[%c0_6, %c0_7] : memref<32x128xbf16, #tpu.memory_space<vmem>>, vector<32x128xbf16>
    %cst_8 = arith.constant dense<0.000000e+00> : vector<16x128xf32>
    %16 = tpu.matmul %14, %15, %cst_8 {dimension_numbers = #tpu.dot_dimension_numbers<[1], [0], [0], [1], [0, 0, 1, 1], [], []>} : vector<16x32xbf16>, vector<32x128xbf16>, vector<16x128xf32> -> vector<16x128xf32>
    %17 = arith.truncf %16 : vector<16x128xf32> to vector<16x128xbf16>
    %c0_9 = arith.constant 0 : index
    %c0_10 = arith.constant 0 : index
    %18 = vector.load %arg4[%c0_9, %c0_10] : memref<16x128xbf16, #tpu.memory_space<vmem>>, vector<16x128xbf16>
    tpu.vector_store %arg4[%c0_9, %c0_10], %17 {strides = array<i32>} : memref<16x128xbf16, #tpu.memory_space<vmem>>, vector<16x128xbf16>,
    return
  }
  func.func @transform_0(%arg0: i32) -> (i32, i32, i32) {
    %c0_i32 = arith.constant 0 : i32
    %c0_i32_0 = arith.constant 0 : i32
    %c0_i32_1 = arith.constant 0 : i32
    return %arg0, %c0_i32, %c0_i32_0 : i32, i32, i32
  }
  func.func @transform_1(%arg0: i32) -> (i32, i32) {
    %c0_i32 = arith.constant 0 : i32
    %c0_i32_0 = arith.constant 0 : i32
    return %arg0, %c0_i32 : i32, i32
  }
  func.func @transform_2(%arg0: i32) -> (i32, i32) {
    %c0_i32 = arith.constant 0 : i32
    %c0_i32_0 = arith.constant 0 : i32
    %c0_i32_1 = arith.constant 0 : i32
    return %c0_i32, %c0_i32_0 : i32, i32
  }
  func.func @transform_3(%arg0: i32) -> (i32, i32) {
    %c0_i32 = arith.constant 0 : i32
    %c0_i32_0 = arith.constant 0 : i32
    return %arg0, %c0_i32 : i32, i32
  }
}

</mosaic_0001>

<llo_original>
// kernel: tpu_custom_call.1
$region0: #{tpu_custom_call.1}
  #allocation0 [shape = 'u32[]', space=smem, size = 0x4, offset = 0x4, fixed_abs, tag = 'smem constant byte address 0x4 - core index']
  #allocation1 [shape = 'u32[144,128]{1,0:T(1,128)}', space=vmem, size = 0x12000, scoped, tag = 'internal scratch']
  %s0 = inlined_call_operand.hbm [shape: bf16[2,8,32], index: 0, kind: input, shape index: {}]
  %s1 = inlined_call_operand.vmem [shape: bf16[2,8], index: 1, kind: input, shape index: {}]
  %s2 = inlined_call_operand.hbm [shape: bf16[32,128], index: 2, kind: input, shape index: {}]
  %s3 = inlined_call_operand.hbm [shape: bf16[2,128], index: 3, kind: output, shape index: {}]
  %s4 = sld [smem:[#allocation0]]
  $region30: #{tpu_custom_call.1} parent=0
    _
  %s6 = ssub.s32 1, %s4
  %s7 = scalar_select 0, %s6, %s4
  $region1: #{tpu_custom_call.1} parent=0
    #allocation2 [shape = 'u8[32768]{0}', space=vmem, size = 0x8000, scoped, tag = 'input window, operand 0, single buffered']
    #allocation3 [shape = 's32[1]{0}', space=sflag, size = 0x4, scoped, tag = 'scoped memory for tpu_custom_call.1']
    #allocation4 [shape = 's32[1]{0}', space=sflag, size = 0x4, scoped, tag = 'scoped memory for tpu_custom_call.1']
    #allocation5 [shape = 'u8[8192]{0}', space=vmem, size = 0x2000, scoped, tag = 'input window, operand 2, single buffered']
    #allocation6 [shape = 's32[1]{0}', space=sflag, size = 0x4, scoped, tag = 'scoped memory for tpu_custom_call.1']
    #allocation7 [shape = 'u8[4096]{0}', space=vmem, size = 0x1000, scoped, tag = 'output window, operand 0, single buffered']
    %8 = vsyncpa [#allocation3], 0
    %9 = vsyncpa [#allocation6], 0
    %10 = vsyncpa [#allocation4], 0
    // Predicated region
    $region2: #{tpu_custom_call.1} parent=1 // pred_check
      _
    $region3: #{tpu_custom_call.1} parent=1 // pred_check_branch
      %12 = sbr.rel (0) target = $region5
    $region4: #{tpu_custom_call.1} parent=1 // pred_region
      %s14 = ssub.s32 1024, 128
      %15 = vsyncadd [#allocation3], %s14
      %s16 = sshll.u32 [#allocation2], 4
      %s17 = int_to_ptr.vmem [resolvable:$true] %s16
      %22 = dma.hbm_to_vmem [thread:$0]  %s0, 128, %s17, [#allocation3], 64, 64, 4
    $region5: #{tpu_custom_call.1} parent=1 // pred_fallthru
      _
    // Predicated region
    $region6: #{tpu_custom_call.1} parent=1 // pred_check
      _
    $region7: #{tpu_custom_call.1} parent=1 // pred_check_branch
      %24 = sbr.rel (0) target = $region9
    $region8: #{tpu_custom_call.1} parent=1 // pred_region
      _
    $region9: #{tpu_custom_call.1} parent=1 // pred_fallthru
      _
    // Predicated region
    $region10: #{tpu_custom_call.1} parent=1 // pred_check
      _
    $region11: #{tpu_custom_call.1} parent=1 // pred_check_branch
      %26 = sbr.rel (0) target = $region13
    $region12: #{tpu_custom_call.1} parent=1 // pred_region
      %s28 = ssub.s32 256, 256
      %29 = vsyncadd [#allocation6], %s28
      %s30 = sshll.u32 [#allocation5], 4
      %s31 = int_to_ptr.vmem [resolvable:$true] %s30
      %36 = dma.hbm_to_vmem [thread:$0]  %s2, 256, %s31, [#allocation6], 64, 64, 4
    $region13: #{tpu_custom_call.1} parent=1 // pred_fallthru
      _
    // Predicated region
    $region14: #{tpu_custom_call.1} parent=1 // pred_check
      _
    $region15: #{tpu_custom_call.1} parent=1 // pred_check_branch
      %38 = sbr.rel (0) target = $region17
    $region16: #{tpu_custom_call.1} parent=1 // pred_region
      %39 = dma.done [#allocation3], 1024
    $region17: #{tpu_custom_call.1} parent=1 // pred_fallthru
      _
    // Predicated region
    $region18: #{tpu_custom_call.1} parent=1 // pred_check
      _
    $region19: #{tpu_custom_call.1} parent=1 // pred_check_branch
      %41 = sbr.rel (0) target = $region21
    $region20: #{tpu_custom_call.1} parent=1 // pred_region
      %42 = dma.done [#allocation6], 256
    $region21: #{tpu_custom_call.1} parent=1 // pred_fallthru
      _
    %v44 = vld [vmem:[#allocation2] sm:$0xf]
    %v45 = vld [vmem:[#allocation2 + $0x4] sm:$0xf]
    %v46 = vld [vmem:[#allocation2 + $0x8] sm:$0xf]
    %v47 = vld [vmem:[#allocation2 + $0xc] sm:$0xf]
    %v48 = vld [vmem:[#allocation2 + $0x10] sm:$0xf]
    %v49 = vld [vmem:[#allocation2 + $0x14] sm:$0xf]
    %v50 = vld [vmem:[#allocation2 + $0x18] sm:$0xf]
    %v51 = vld [vmem:[#allocation2 + $0x1c] sm:$0xf]
    %v52 = vld [vmem:[#allocation2 + $0x20] sm:$0xf]
    %v53 = vld [vmem:[#allocation2 + $0x24] sm:$0xf]
    %v54 = vld [vmem:[#allocation2 + $0x28] sm:$0xf]
    %v55 = vld [vmem:[#allocation2 + $0x2c] sm:$0xf]
    %v56 = vld [vmem:[#allocation2 + $0x30] sm:$0xf]
    %v57 = vld [vmem:[#allocation2 + $0x34] sm:$0xf]
    %v58 = vld [vmem:[#allocation2 + $0x38] sm:$0xf]
    %v59 = vld [vmem:[#allocation2 + $0x3c] sm:$0xf]
    %v60 = vunpack.c.l.bf16 %v44
    %v61 = vunpack.c.l.bf16 %v45
    %v62 = vunpack.c.l.bf16 %v46
    %v63 = vunpack.c.l.bf16 %v47
    %v64 = vunpack.c.l.bf16 %v48
    %v65 = vunpack.c.l.bf16 %v49
    %v66 = vunpack.c.l.bf16 %v50
    %v67 = vunpack.c.l.bf16 %v51
    %v68 = vunpack.c.l.bf16 %v52
    %v69 = vunpack.c.l.bf16 %v53
    %v70 = vunpack.c.l.bf16 %v54
    %v71 = vunpack.c.l.bf16 %v55
    %v72 = vunpack.c.l.bf16 %v56
    %v73 = vunpack.c.l.bf16 %v57
    %v74 = vunpack.c.l.bf16 %v58
    %v75 = vunpack.c.l.bf16 %v59
    %v76 = vld [vmem:[%s1] sm:$0x1]
    %v77 = vld [vmem:[%s1 + $0x1] sm:$0x1]
    %v78 = vld [vmem:[%s1 + $0x2] sm:$0x1]
    %v79 = vld [vmem:[%s1 + $0x3] sm:$0x1]
    %v80 = vld [vmem:[%s1 + $0x4] sm:$0x1]
    %v81 = vld [vmem:[%s1 + $0x5] sm:$0x1]
    %v82 = vld [vmem:[%s1 + $0x6] sm:$0x1]
    %v83 = vld [vmem:[%s1 + $0x7] sm:$0x1]
    %v84 = vunpack.c.l.bf16 %v76
    %v85 = vunpack.c.l.bf16 %v77
    %v86 = vunpack.c.l.bf16 %v78
    %v87 = vunpack.c.l.bf16 %v79
    %v88 = vunpack.c.l.bf16 %v80
    %v89 = vunpack.c.l.bf16 %v81
    %v90 = vunpack.c.l.bf16 %v82
    %v91 = vunpack.c.l.bf16 %v83
    %v100 = vcombine.low %v84, %v85
    %v101 = vcombine.low %v86, %v87
    %v103 = vunpack.c.l.s4 1983009808
    %v104 = vunpack.c.0.s8 %v103
    %v105 = vlaneseq
    %v106 = vshrl.u32 %v105, 7
    %v107 = vsub.s32 %v104, %v106
    %v108 = vrot.slane %v100, %v107
    %v110 = vunpack.c.l.s4 1983009808
    %v111 = vunpack.c.0.s8 %v110
    %v112 = vlaneseq
    %v113 = vshrl.u32 %v112, 7
    %v114 = vsub.s32 %v111, %v113
    %v115 = vrot.slane %v101, %v114
    %v116 = vcombine.low %v108, %v115
    %v117 = vcombine.low %v88, %v89
    %v118 = vcombine.low %v90, %v91
    %v120 = vunpack.c.l.s4 1983009808
    %v121 = vunpack.c.0.s8 %v120
    %v122 = vlaneseq
    %v123 = vshrl.u32 %v122, 7
    %v124 = vsub.s32 %v121, %v123
    %v125 = vrot.slane %v117, %v124
    %v127 = vunpack.c.l.s4 1983009808
    %v128 = vunpack.c.0.s8 %v127
    %v129 = vlaneseq
    %v130 = vshrl.u32 %v129, 7
    %v131 = vsub.s32 %v128, %v130
    %v132 = vrot.slane %v118, %v131
    %v133 = vcombine.low %v125, %v132
    %v136 = vlaneseq
    %v137 = vshrl.u32 %v136, 7
    %v138 = vsub.s32 0, %v137
    %v139 = vrot.slane %v116, %v138
    %141 = vbcast.lane.b32.xlu0 %v139, 256
    %v142 = vpop.permute.xlu0 %141
    %v143 = vlaneseq
    %v144 = vshrl.u32 %v143, 7
    %v145 = vsub.s32 1, %v144
    %v146 = vrot.slane %v116, %v145
    %148 = vbcast.lane.b32.xlu0 %v146, 256
    %v149 = vpop.permute.xlu0 %148
    %v150 = vlaneseq
    %v151 = vshrl.u32 %v150, 7
    %v152 = vsub.s32 2, %v151
    %v153 = vrot.slane %v116, %v152
    %155 = vbcast.lane.b32.xlu0 %v153, 256
    %v156 = vpop.permute.xlu0 %155
    %v157 = vlaneseq
    %v158 = vshrl.u32 %v157, 7
    %v159 = vsub.s32 3, %v158
    %v160 = vrot.slane %v116, %v159
    %162 = vbcast.lane.b32.xlu0 %v160, 256
    %v163 = vpop.permute.xlu0 %162
    %v164 = vlaneseq
    %v165 = vshrl.u32 %v164, 7
    %v166 = vsub.s32 4, %v165
    %v167 = vrot.slane %v116, %v166
    %169 = vbcast.lane.b32.xlu0 %v167, 256
    %v170 = vpop.permute.xlu0 %169
    %v171 = vlaneseq
    %v172 = vshrl.u32 %v171, 7
    %v173 = vsub.s32 5, %v172
    %v174 = vrot.slane %v116, %v173
    %176 = vbcast.lane.b32.xlu0 %v174, 256
    %v177 = vpop.permute.xlu0 %176
    %v178 = vlaneseq
    %v179 = vshrl.u32 %v178, 7
    %v180 = vsub.s32 6, %v179
    %v181 = vrot.slane %v116, %v180
    %183 = vbcast.lane.b32.xlu0 %v181, 256
    %v184 = vpop.permute.xlu0 %183
    %v185 = vlaneseq
    %v186 = vshrl.u32 %v185, 7
    %v187 = vsub.s32 7, %v186
    %v188 = vrot.slane %v116, %v187
    %190 = vbcast.lane.b32.xlu0 %v188, 256
    %v191 = vpop.permute.xlu0 %190
    %v192 = vlaneseq
    %v193 = vshrl.u32 %v192, 7
    %v194 = vsub.s32 0, %v193
    %v195 = vrot.slane %v133, %v194
    %197 = vbcast.lane.b32.xlu0 %v195, 256
    %v198 = vpop.permute.xlu0 %197
    %v199 = vlaneseq
    %v200 = vshrl.u32 %v199, 7
    %v201 = vsub.s32 1, %v200
    %v202 = vrot.slane %v133, %v201
    %204 = vbcast.lane.b32.xlu0 %v202, 256
    %v205 = vpop.permute.xlu0 %204
    %v206 = vlaneseq
    %v207 = vshrl.u32 %v206, 7
    %v208 = vsub.s32 2, %v207
    %v209 = vrot.slane %v133, %v208
    %211 = vbcast.lane.b32.xlu0 %v209, 256
    %v212 = vpop.permute.xlu0 %211
    %v213 = vlaneseq
    %v214 = vshrl.u32 %v213, 7
    %v215 = vsub.s32 3, %v214
    %v216 = vrot.slane %v133, %v215
    %218 = vbcast.lane.b32.xlu0 %v216, 256
    %v219 = vpop.permute.xlu0 %218
    %v220 = vlaneseq
    %v221 = vshrl.u32 %v220, 7
    %v222 = vsub.s32 4, %v221
    %v223 = vrot.slane %v133, %v222
    %225 = vbcast.lane.b32.xlu0 %v223, 256
    %v226 = vpop.permute.xlu0 %225
    %v227 = vlaneseq
    %v228 = vshrl.u32 %v227, 7
    %v229 = vsub.s32 5, %v228
    %v230 = vrot.slane %v133, %v229
    %232 = vbcast.lane.b32.xlu0 %v230, 256
    %v233 = vpop.permute.xlu0 %232
    %v234 = vlaneseq
    %v235 = vshrl.u32 %v234, 7
    %v236 = vsub.s32 6, %v235
    %v237 = vrot.slane %v133, %v236
    %239 = vbcast.lane.b32.xlu0 %v237, 256
    %v240 = vpop.permute.xlu0 %239
    %v241 = vlaneseq
    %v242 = vshrl.u32 %v241, 7
    %v243 = vsub.s32 7, %v242
    %v244 = vrot.slane %v133, %v243
    %246 = vbcast.lane.b32.xlu0 %v244, 256
    %v247 = vpop.permute.xlu0 %246
    %v248 = vmul.f32 %v60, %v142
    %v249 = vmul.f32 %v61, %v149
    %v250 = vmul.f32 %v62, %v156
    %v251 = vmul.f32 %v63, %v163
    %v252 = vmul.f32 %v64, %v170
    %v253 = vmul.f32 %v65, %v177
    %v254 = vmul.f32 %v66, %v184
    %v255 = vmul.f32 %v67, %v191
    %v256 = vmul.f32 %v68, %v198
    %v257 = vmul.f32 %v69, %v205
    %v258 = vmul.f32 %v70, %v212
    %v259 = vmul.f32 %v71, %v219
    %v260 = vmul.f32 %v72, %v226
    %v261 = vmul.f32 %v73, %v233
    %v262 = vmul.f32 %v74, %v240
    %v263 = vmul.f32 %v75, %v247
    %vm264 = vcmask 261120
    %v265 = vsel %vm264, %v248, 0.0
    %v266 = vrot.slane %v265, 4
    %v267 = vadd.f32 %v265, %v266
    %v268 = vrot.slane %v267, 2
    %v269 = vadd.f32 %v267, %v268
    %v270 = vrot.slane %v269, 1
    %v271 = vadd.f32 %v269, %v270
    %v272 = vsel %vm264, %v249, 0.0
    %v273 = vrot.slane %v272, 4
    %v274 = vadd.f32 %v272, %v273
    %v275 = vrot.slane %v274, 2
    %v276 = vadd.f32 %v274, %v275
    %v277 = vrot.slane %v276, 1
    %v278 = vadd.f32 %v276, %v277
    %v279 = vsel %vm264, %v250, 0.0
    %v280 = vrot.slane %v279, 4
    %v281 = vadd.f32 %v279, %v280
    %v282 = vrot.slane %v281, 2
    %v283 = vadd.f32 %v281, %v282
    %v284 = vrot.slane %v283, 1
    %v285 = vadd.f32 %v283, %v284
    %v286 = vsel %vm264, %v251, 0.0
    %v287 = vrot.slane %v286, 4
    %v288 = vadd.f32 %v286, %v287
    %v289 = vrot.slane %v288, 2
    %v290 = vadd.f32 %v288, %v289
    %v291 = vrot.slane %v290, 1
    %v292 = vadd.f32 %v290, %v291
    %v293 = vsel %vm264, %v252, 0.0
    %v294 = vrot.slane %v293, 4
    %v295 = vadd.f32 %v293, %v294
    %v296 = vrot.slane %v295, 2
    %v297 = vadd.f32 %v295, %v296
    %v298 = vrot.slane %v297, 1
    %v299 = vadd.f32 %v297, %v298
    %v300 = vsel %vm264, %v253, 0.0
    %v301 = vrot.slane %v300, 4
    %v302 = vadd.f32 %v300, %v301
    %v303 = vrot.slane %v302, 2
    %v304 = vadd.f32 %v302, %v303
    %v305 = vrot.slane %v304, 1
    %v306 = vadd.f32 %v304, %v305
    %v307 = vsel %vm264, %v254, 0.0
    %v308 = vrot.slane %v307, 4
    %v309 = vadd.f32 %v307, %v308
    %v310 = vrot.slane %v309, 2
    %v311 = vadd.f32 %v309, %v310
    %v312 = vrot.slane %v311, 1
    %v313 = vadd.f32 %v311, %v312
    %v314 = vsel %vm264, %v255, 0.0
    %v315 = vrot.slane %v314, 4
    %v316 = vadd.f32 %v314, %v315
    %v317 = vrot.slane %v316, 2
    %v318 = vadd.f32 %v316, %v317
    %v319 = vrot.slane %v318, 1
    %v320 = vadd.f32 %v318, %v319
    %v321 = vsel %vm264, %v256, 0.0
    %v322 = vrot.slane %v321, 4
    %v323 = vadd.f32 %v321, %v322
    %v324 = vrot.slane %v323, 2
    %v325 = vadd.f32 %v323, %v324
    %v326 = vrot.slane %v325, 1
    %v327 = vadd.f32 %v325, %v326
    %v328 = vsel %vm264, %v257, 0.0
    %v329 = vrot.slane %v328, 4
    %v330 = vadd.f32 %v328, %v329
    %v331 = vrot.slane %v330, 2
    %v332 = vadd.f32 %v330, %v331
    %v333 = vrot.slane %v332, 1
    %v334 = vadd.f32 %v332, %v333
    %v335 = vsel %vm264, %v258, 0.0
    %v336 = vrot.slane %v335, 4
    %v337 = vadd.f32 %v335, %v336
    %v338 = vrot.slane %v337, 2
    %v339 = vadd.f32 %v337, %v338
    %v340 = vrot.slane %v339, 1
    %v341 = vadd.f32 %v339, %v340
    %v342 = vsel %vm264, %v259, 0.0
    %v343 = vrot.slane %v342, 4
    %v344 = vadd.f32 %v342, %v343
    %v345 = vrot.slane %v344, 2
    %v346 = vadd.f32 %v344, %v345
    %v347 = vrot.slane %v346, 1
    %v348 = vadd.f32 %v346, %v347
    %v349 = vsel %vm264, %v260, 0.0
    %v350 = vrot.slane %v349, 4
    %v351 = vadd.f32 %v349, %v350
    %v352 = vrot.slane %v351, 2
    %v353 = vadd.f32 %v351, %v352
    %v354 = vrot.slane %v353, 1
    %v355 = vadd.f32 %v353, %v354
    %v356 = vsel %vm264, %v261, 0.0
    %v357 = vrot.slane %v356, 4
    %v358 = vadd.f32 %v356, %v357
    %v359 = vrot.slane %v358, 2
    %v360 = vadd.f32 %v358, %v359
    %v361 = vrot.slane %v360, 1
    %v362 = vadd.f32 %v360, %v361
    %v363 = vsel %vm264, %v262, 0.0
    %v364 = vrot.slane %v363, 4
    %v365 = vadd.f32 %v363, %v364
    %v366 = vrot.slane %v365, 2
    %v367 = vadd.f32 %v365, %v366
    %v368 = vrot.slane %v367, 1
    %v369 = vadd.f32 %v367, %v368
    %v370 = vsel %vm264, %v263, 0.0
    %v371 = vrot.slane %v370, 4
    %v372 = vadd.f32 %v370, %v371
    %v373 = vrot.slane %v372, 2
    %v374 = vadd.f32 %v372, %v373
    %v375 = vrot.slane %v374, 1
    %v376 = vadd.f32 %v374, %v375
    %vm377 = vcmask 64512
    %v378 = vsel %vm377, %v116, 0.0
    %379 = vadd.xlane.f32.xlu0 %v378
    %v380 = vpop.xlane.xlu0 %379
    %v381 = vsel %vm377, %v133, 0.0
    %382 = vadd.xlane.f32.xlu0 %v381
    %v383 = vpop.xlane.xlu0 %382
    %v384 = vmax.f32 %v380, 1e-09
    %v385 = vmax.f32 %v383, 1e-09
    %v388 = vrot.slane %v384, 1
    %v389 = vrot.slane %v384, 2
    %v390 = vrot.slane %v384, 3
    %v391 = vrot.slane %v384, 4
    %v392 = vrot.slane %v384, 5
    %v393 = vrot.slane %v384, 6
    %v394 = vrot.slane %v384, 7
    %v395 = vrot.slane %v385, 1
    %v396 = vrot.slane %v385, 2
    %v397 = vrot.slane %v385, 3
    %v398 = vrot.slane %v385, 4
    %v399 = vrot.slane %v385, 5
    %v400 = vrot.slane %v385, 6
    %v401 = vrot.slane %v385, 7
    %v418 = vrcp.pop %v384
    %v419 = vmul.f32 %v271, %v418
    %v420 = vrcp.pop %v388
    %v421 = vmul.f32 %v278, %v420
    %v422 = vrcp.pop %v389
    %v423 = vmul.f32 %v285, %v422
    %v424 = vrcp.pop %v390
    %v425 = vmul.f32 %v292, %v424
    %v426 = vrcp.pop %v391
    %v427 = vmul.f32 %v299, %v426
    %v428 = vrcp.pop %v392
    %v429 = vmul.f32 %v306, %v428
    %v430 = vrcp.pop %v393
    %v431 = vmul.f32 %v313, %v430
    %v432 = vrcp.pop %v394
    %v433 = vmul.f32 %v320, %v432
    %v434 = vrcp.pop %v385
    %v435 = vmul.f32 %v327, %v434
    %v436 = vrcp.pop %v395
    %v437 = vmul.f32 %v334, %v436
    %v438 = vrcp.pop %v396
    %v439 = vmul.f32 %v341, %v438
    %v440 = vrcp.pop %v397
    %v441 = vmul.f32 %v348, %v440
    %v442 = vrcp.pop %v398
    %v443 = vmul.f32 %v355, %v442
    %v444 = vrcp.pop %v399
    %v445 = vmul.f32 %v362, %v444
    %v446 = vrcp.pop %v400
    %v447 = vmul.f32 %v369, %v446
    %v448 = vrcp.pop %v401
    %v449 = vmul.f32 %v376, %v448
    %v450 = vpack.c.bf16 %v419, %v419
    %v451 = vpack.c.bf16 %v421, %v421
    %v452 = vpack.c.bf16 %v423, %v423
    %v453 = vpack.c.bf16 %v425, %v425
    %v454 = vpack.c.bf16 %v427, %v427
    %v455 = vpack.c.bf16 %v429, %v429
    %v456 = vpack.c.bf16 %v431, %v431
    %v457 = vpack.c.bf16 %v433, %v433
    %v458 = vpack.c.bf16 %v435, %v435
    %v459 = vpack.c.bf16 %v437, %v437
    %v460 = vpack.c.bf16 %v439, %v439
    %v461 = vpack.c.bf16 %v441, %v441
    %v462 = vpack.c.bf16 %v443, %v443
    %v463 = vpack.c.bf16 %v445, %v445
    %v464 = vpack.c.bf16 %v447, %v447
    %v465 = vpack.c.bf16 %v449, %v449
    %v466 = vld [vmem:[#allocation5] sm:$0xf]
    %v467 = vld [vmem:[#allocation5 + $0x4] sm:$0xf]
    %v468 = vld [vmem:[#allocation5 + $0x8] sm:$0xf]
    %v469 = vld [vmem:[#allocation5 + $0xc] sm:$0xf]
    %v486 = vunpack.c.l.b16 %v450
    %v487 = vunpack.c.l.b16 %v451
    %v488 = vunpack.c.l.b16 %v452
    %v489 = vunpack.c.l.b16 %v453
    %v490 = vunpack.c.l.b16 %v454
    %v491 = vunpack.c.l.b16 %v455
    %v492 = vunpack.c.l.b16 %v456
    %v493 = vunpack.c.l.b16 %v457
    %v494 = vunpack.c.l.b16 %v458
    %v495 = vunpack.c.l.b16 %v459
    %v496 = vunpack.c.l.b16 %v460
    %v497 = vunpack.c.l.b16 %v461
    %v498 = vunpack.c.l.b16 %v462
    %v499 = vunpack.c.l.b16 %v463
    %v500 = vunpack.c.l.b16 %v464
    %v501 = vunpack.c.l.b16 %v465
    %v502 = vrot.slane %v487, 7
    %vm503 = vcmask 1041409
    %v504 = vsel %vm503, %v502, %v486
    %v505 = vrot.slane %v488, 6
    %vm506 = vcmask 1042434
    %v507 = vsel %vm506, %v505, %v504
    %v508 = vrot.slane %v489, 5
    %vm509 = vcmask 1043459
    %v510 = vsel %vm509, %v508, %v507
    %v511 = vrot.slane %v490, 4
    %vm512 = vcmask 1044484
    %v513 = vsel %vm512, %v511, %v510
    %v514 = vrot.slane %v491, 3
    %vm515 = vcmask 1045509
    %v516 = vsel %vm515, %v514, %v513
    %v517 = vrot.slane %v492, 2
    %vm518 = vcmask 1046534
    %v519 = vsel %vm518, %v517, %v516
    %v520 = vrot.slane %v493, 1
    %vm521 = vcmask 1047559
    %v522 = vsel %vm521, %v520, %v519
    %v523 = vrot.slane %v495, 7
    %v524 = vsel %vm503, %v523, %v494
    %v525 = vrot.slane %v496, 6
    %v526 = vsel %vm506, %v525, %v524
    %v527 = vrot.slane %v497, 5
    %v528 = vsel %vm509, %v527, %v526
    %v529 = vrot.slane %v498, 4
    %v530 = vsel %vm512, %v529, %v528
    %v531 = vrot.slane %v499, 3
    %v532 = vsel %vm515, %v531, %v530
    %v533 = vrot.slane %v500, 2
    %v534 = vsel %vm518, %v533, %v532
    %v535 = vrot.slane %v501, 1
    %v536 = vsel %vm521, %v535, %v534
    %v537 = vpack.c.b16 %v536, %v522
    %v542 = vunpack.c.l.b16 %v466
    %v543 = vunpack.c.l.b16 %v467
    %v544 = vunpack.c.l.b16 %v468
    %v545 = vunpack.c.l.b16 %v469
    %v546 = vpack.c.b16 %v543, %v542
    %v547 = vpack.c.b16 %v545, %v544
    %v551 = vsel %vm264, %v537, 0
    %553 = vmatprep.subr.bf16.mxu0 0
    %554 = vmatpush1.bf16.msra.mxu0 %v546
    %555 = vmatprep.subr.bf16.mxu0 0
    %556 = vmatpush1.bf16.msra.mxu0 %v547
    %557 = vmatprep.subr.bf16.mxu0 0
    %558 = vmatpush1.bf16.msra.mxu0 0
    %559 = vmatprep.subr.bf16.mxu0 0
    %560 = vmatpush1.bf16.msra.mxu0 0
    %561 = vmatprep.subr.bf16.mxu0 0
    %562 = vmatpush1.bf16.msra.mxu0 0
    %563 = vmatprep.subr.bf16.mxu0 0
    %564 = vmatpush1.bf16.msra.mxu0 0
    %565 = vmatprep.subr.bf16.mxu0 0
    %566 = vmatpush1.bf16.msra.mxu0 0
    %567 = vmatprep.subr.bf16.mxu0 0
    %568 = vmatpush1.bf16.msra.mxu0 0
    %569 = vmatprep.subr.bf16.mxu0 0
    %570 = vmatpush1.bf16.msra.mxu0 0
    %571 = vmatprep.subr.bf16.mxu0 0
    %572 = vmatpush1.bf16.msra.mxu0 0
    %573 = vmatprep.subr.bf16.mxu0 0
    %574 = vmatpush1.bf16.msra.mxu0 0
    %575 = vmatprep.subr.bf16.mxu0 0
    %576 = vmatpush1.bf16.msra.mxu0 0
    %577 = vmatprep.subr.bf16.mxu0 0
    %578 = vmatpush1.bf16.msra.mxu0 0
    %579 = vmatprep.subr.bf16.mxu0 0
    %580 = vmatpush1.bf16.msra.mxu0 0
    %581 = vmatprep.subr.bf16.mxu0 0
    %582 = vmatpush1.bf16.msra.mxu0 0
    %583 = vmatprep.subr.bf16.mxu0 0
    %584 = vmatpush1.bf16.msra.mxu0 0
    %585 = vmatprep.mubr.bf16.mxu0 0
    %586 = vmatmul.mubr.bf16.gmra.mrb[0].mxu0 %v551
    %v587 = vpop.f32.mrb[0].mxu0
    %v588 = vadd.f32 0.0, %v587
    %v589 = vpop.f32.mrb[0].mxu0
    %v590 = vpop.f32.mrb[0].mxu0
    %v591 = vadd.f32 0.0, %v590
    %v592 = vpop.f32.mrb[0].mxu0
    %593 = vdwg.mxu0
    %v594 = vpack.c.bf16 %v591, %v588
    %v596 = vcombine.high %v594, %v594
    %v598 = vunpack.c.l.s4 1966171168
    %v599 = vunpack.c.0.s8 %v598
    %v600 = vlaneseq
    %v601 = vshrl.u32 %v600, 7
    %v602 = vsub.s32 %v599, %v601
    %v603 = vrot.slane %v594, %v602
    %v605 = vunpack.c.l.s4 1966171168
    %v606 = vunpack.c.0.s8 %v605
    %v607 = vlaneseq
    %v608 = vshrl.u32 %v607, 7
    %v609 = vsub.s32 %v606, %v608
    %v610 = vrot.slane %v596, %v609
    %v611 = vcombine.high %v603, %v603
    %v612 = vcombine.high %v610, %v610
    %v614 = vunpack.c.l.s4 1966171168
    %v615 = vunpack.c.0.s8 %v614
    %v616 = vlaneseq
    %v617 = vshrl.u32 %v616, 7
    %v618 = vsub.s32 %v615, %v617
    %v619 = vrot.slane %v603, %v618
    %v621 = vunpack.c.l.s4 1966171168
    %v622 = vunpack.c.0.s8 %v621
    %v623 = vlaneseq
    %v624 = vshrl.u32 %v623, 7
    %v625 = vsub.s32 %v622, %v624
    %v626 = vrot.slane %v610, %v625
    %v628 = vunpack.c.l.s4 1966171168
    %v629 = vunpack.c.0.s8 %v628
    %v630 = vlaneseq
    %v631 = vshrl.u32 %v630, 7
    %v632 = vsub.s32 %v629, %v631
    %v633 = vrot.slane %v611, %v632
    %v635 = vunpack.c.l.s4 1966171168
    %v636 = vunpack.c.0.s8 %v635
    %v637 = vlaneseq
    %v638 = vshrl.u32 %v637, 7
    %v639 = vsub.s32 %v636, %v638
    %v640 = vrot.slane %v612, %v639
    %v641 = vcombine.high %v619, %v619
    %v642 = vcombine.high %v626, %v626
    %v643 = vcombine.high %v633, %v633
    %v644 = vcombine.high %v640, %v640
    %653 = vst [vmem:[#allocation7] sm:$0x1] %v619
    %654 = vst [vmem:[#allocation7 + $0x1] sm:$0x1] %v633
    %655 = vst [vmem:[#allocation7 + $0x2] sm:$0x1] %v641
    %656 = vst [vmem:[#allocation7 + $0x3] sm:$0x1] %v643
    %657 = vst [vmem:[#allocation7 + $0x4] sm:$0x1] %v626
    %658 = vst [vmem:[#allocation7 + $0x5] sm:$0x1] %v640
    %659 = vst [vmem:[#allocation7 + $0x6] sm:$0x1] %v642
    %660 = vst [vmem:[#allocation7 + $0x7] sm:$0x1] %v644
    // Predicated region
    $region22: #{tpu_custom_call.1} parent=1 // pred_check
      _
    $region23: #{tpu_custom_call.1} parent=1 // pred_check_branch
      %662 = sbr.rel (0) target = $region25
    $region24: #{tpu_custom_call.1} parent=1 // pred_region
      %s664 = ssub.s32 128, 16
      %665 = vsyncadd [#allocation4], %s664
      %s666 = sshll.u32 [#allocation7], 4
      %s667 = int_to_ptr.vmem [resolvable:$true] %s666
      %672 = dma.vmem_to_hbm [thread:$0]  %s667, 16, %s3, [#allocation4], 16, 16, 1
    $region25: #{tpu_custom_call.1} parent=1 // pred_fallthru
      _
    // Predicated region
    $region26: #{tpu_custom_call.1} parent=1 // pred_check
      _
    $region27: #{tpu_custom_call.1} parent=1 // pred_check_branch
      %674 = sbr.rel (0) target = $region29
    $region28: #{tpu_custom_call.1} parent=1 // pred_region
      %675 = dma.done [#allocation4], 128
    $region29: #{tpu_custom_call.1} parent=1 // pred_fallthru
      _
    %676 = vsyncpa [#allocation3], 1
    %677 = vsyncpa [#allocation6], 1
    %678 = vsyncpa [#allocation4], 1

</llo_original>
